<compile_context>
chip_gen: v7x
topology: tpu7x:2x2x1
jax: 0.10.0
libtpu: 0.0.40
codegen_flags: <defaults>
</compile_context>

<pallas_src>
import functools
import math

import jax
import jax.numpy as jnp
from jax.experimental import pallas as pl
from jax.experimental.pallas import tpu as pltpu


# ----------------------------------------------------------------------------
# Fused Pallas kernel (Bt sequences per grid step)
# ----------------------------------------------------------------------------
def duration_predictor_kernel(x_ref, w1_ref, b1_ref, g1_ref, be1_ref,
                              w2_ref, b2_ref, g2_ref, be2_ref,
                              wl_ref, bl_ref, o_ref, *, Bt, L, D, Dp):
    M = Bt * L
    inv_d = 1.0 / D   # LayerNorm statistics always use the true channel count.

    def conv3(h, w_ref, b_row):
        # h: (Bt, L, C) bf16; w_ref: (3, C, Dp) bf16; b_row: (1, Dp) f32.
        # 'same' conv = per-sequence zero halo + three accumulated MXU dots.
        C = h.shape[-1]
        z = jnp.zeros((Bt, 1, C), h.dtype)
        hm = jnp.concatenate([z, h[:, :L - 1, :]], axis=1)      # h[l-1], zero at l=0
        hp = jnp.concatenate([h[:, 1:, :], z], axis=1)          # h[l+1], zero at l=L-1
        acc = jnp.dot(hm.reshape(M, C), w_ref[0], preferred_element_type=jnp.float32)
        acc = acc + jnp.dot(h.reshape(M, C), w_ref[1], preferred_element_type=jnp.float32)
        acc = acc + jnp.dot(hp.reshape(M, C), w_ref[2], preferred_element_type=jnp.float32)
        return acc + b_row                                       # (M, Dp) f32

    def ln_relu(v, g, b):
        # Padded channels of v are exactly zero, so plain lane sums are correct
        # provided we divide by the true D (not Dp).
        mu = jnp.sum(v, axis=-1, keepdims=True) * inv_d
        ex2 = jnp.sum(v * v, axis=-1, keepdims=True) * inv_d
        var = ex2 - mu * mu
        y = (v - mu) * jax.lax.rsqrt(var + 1e-5) * g + b         # padded g/b are 0
        return jnp.maximum(y, 0.0)

    x = x_ref[...]                                                # (Bt, L, D) bf16
    h = ln_relu(conv3(x, w1_ref, b1_ref[...]), g1_ref[...], be1_ref[...])   # (M, Dp) f32
    h = h.astype(jnp.bfloat16).reshape(Bt, L, Dp)
    h = ln_relu(conv3(h, w2_ref, b2_ref[...]), g2_ref[...], be2_ref[...])   # (M, Dp) f32
    # Linear(D, 1): lane reduction against the zero-padded weight row + scalar bias.
    dur = jnp.sum(h.reshape(Bt, L, Dp) * wl_ref[...], axis=-1) + bl_ref[0]  # (Bt, L)
    o_ref[...] = dur.reshape(1, Bt, L)


def _choose_batch_tile(B, L, target_rows=256):
    """Bt sequences per grid step: aim for Bt*L >= target_rows, keep grid >= 2."""
    bt = min(B, max(1, -(-target_rows // L)))      # ceil(target_rows / L), capped
    if B >= 2:
        bt = max(1, min(bt, B // 2))               # >= 2 grid steps for v7x megacore
    while B % bt:                                  # need bt | B for exact blocking
        bt -= 1
    return bt


# ----------------------------------------------------------------------------
# Wrapper
# ----------------------------------------------------------------------------
def duration_predictor_pallas(x, p):
    """x: (B, L, D) float32 -> (B, L, 1) float32 (matches the PyTorch module)."""
    B, L, D = x.shape
    Dp = ((D + 127) // 128) * 128                  # channel axis -> full 128-lane vregs
    bt = _choose_batch_tile(B, L)
    G = B // bt

    x_bf = x.astype(jnp.bfloat16)                  # halve HBM DMA; no sequence pad

    # Zero-pad the (tiny, grid-resident) weights once on the wrapper side.
    w1 = jnp.pad(p['w1'], ((0, 0), (0, 0), (0, Dp - D))).astype(jnp.bfloat16)      # (3, D, Dp)
    w2 = jnp.pad(p['w2'], ((0, 0), (0, Dp - D), (0, Dp - D))).astype(jnp.bfloat16)  # (3, Dp, Dp)

    def row(v):                                    # (D,) -> zero-padded (1, Dp) f32
        return jnp.pad(v.astype(jnp.float32), (0, Dp - D)).reshape(1, Dp)

    kern = functools.partial(duration_predictor_kernel, Bt=bt, L=L, D=D, Dp=Dp)
    rspec = pl.BlockSpec((1, Dp), lambda b: (0, 0))

    out = pl.pallas_call(
        kern,
        out_shape=jax.ShapeDtypeStruct((G, bt, L), jnp.float32),
        grid=(G,),
        in_specs=[
            pl.BlockSpec((bt, L, D), lambda b: (b, 0, 0)),        # activations (unpadded)
            pl.BlockSpec((3, D, Dp), lambda b: (0, 0, 0)),        # conv1 weight
            rspec, rspec, rspec,                                  # conv1 bias, ln1 g/b
            pl.BlockSpec((3, Dp, Dp), lambda b: (0, 0, 0)),       # conv2 weight
            rspec, rspec, rspec,                                  # conv2 bias, ln2 g/b
            rspec,                                                # linear weight row
            pl.BlockSpec(memory_space=pltpu.MemorySpace.SMEM),    # linear bias scalar
        ],
        out_specs=pl.BlockSpec((1, bt, L), lambda b: (b, 0, 0)),  # lane-dense (last dim L)
        compiler_params=pltpu.CompilerParams(
            dimension_semantics=("parallel",),
            vmem_limit_bytes=48 * 1024 * 1024),                   # < v7x 64 MiB physical
    )(x_bf,
      w1, row(p['b1']), row(p['g1']), row(p['be1']),
      w2, row(p['b2']), row(p['g2']), row(p['be2']),
      row(p['wl']), p['bl'].astype(jnp.float32).reshape(1))

    return out.reshape(B, L)[..., None]


# ----------------------------------------------------------------------------
# Pure-JAX reference (f32) and parameter init
# ----------------------------------------------------------------------------
def duration_predictor_ref(x, p):
    def conv_same(v, w, b):
        K = w.shape[0]
        pad = (K - 1) // 2
        vp = jnp.pad(v, ((0, 0), (pad, pad), (0, 0)))
        L = v.shape[1]
        acc = jnp.zeros(v.shape[:2] + (w.shape[2],), jnp.float32)
        for t in range(K):
            acc = acc + jnp.einsum('blc,cd->bld', vp[:, t:t + L, :], w[t])
        return acc + b

    def ln(v, g, b):
        mu = v.mean(-1, keepdims=True)
        var = ((v - mu) ** 2).mean(-1, keepdims=True)
        return (v - mu) * jax.lax.rsqrt(var + 1e-5) * g + b

    y = jnp.maximum(ln(conv_same(x, p['w1'], p['b1']), p['g1'], p['be1']), 0.0)
    y = jnp.maximum(ln(conv_same(y, p['w2'], p['b2']), p['g2'], p['be2']), 0.0)
    return jnp.einsum('bld,d->bl', y, p['wl'])[..., None] + p['bl']


def init_params(key, D):
    ks = jax.random.split(key, 6)

    def u(k, shape, bound):
        return jax.random.uniform(k, shape, jnp.float32, -bound, bound)

    cb = 1.0 / math.sqrt(3 * D)   # conv fan-in = K * Cin
    lb = 1.0 / math.sqrt(D)
    return dict(
        w1=u(ks[0], (3, D, D), cb), b1=u(ks[1], (D,), cb),
        g1=jnp.ones((D,), jnp.float32), be1=jnp.zeros((D,), jnp.float32),
        w2=u(ks[2], (3, D, D), cb), b2=u(ks[3], (D,), cb),
        g2=jnp.ones((D,), jnp.float32), be2=jnp.zeros((D,), jnp.float32),
        wl=u(ks[4], (D,), lb), bl=u(ks[5], (1,), lb),
    )


# ----------------------------------------------------------------------------
# Driver
# ----------------------------------------------------------------------------
if __name__ == "__main__":
    B, S, D = 2, 8, 32   # batch, sequence length, embedding_size

    key = jax.random.PRNGKey(0)
    kx, kp = jax.random.split(key)
    x = jax.random.normal(kx, (B, S, D), jnp.float32)
    params = init_params(kp, D)

    out = duration_predictor_pallas(x, params)
    jax.block_until_ready(out)

    assert out.shape == (B, S, 1)
    assert bool(jnp.all(jnp.isfinite(out)))
    ref = duration_predictor_ref(x, params)
    # bf16 MXU operands in the kernel vs f32 reference -> loose tolerance.
    assert bool(jnp.allclose(out, ref, atol=5e-2, rtol=5e-2))
    print("KERNEL_OK")
</pallas_src>

<mosaic_0001>
module attributes {stable_mosaic.version = 11 : i64} {
  func.func @duration_predictor_kernel(%arg0: i32, %arg1: memref<1x8x32xbf16, #tpu.memory_space<vmem>>, %arg2: memref<3x32x128xbf16, #tpu.memory_space<vmem>>, %arg3: memref<1x128xf32, #tpu.memory_space<vmem>>, %arg4: memref<1x128xf32, #tpu.memory_space<vmem>>, %arg5: memref<1x128xf32, #tpu.memory_space<vmem>>, %arg6: memref<3x128x128xbf16, #tpu.memory_space<vmem>>, %arg7: memref<1x128xf32, #tpu.memory_space<vmem>>, %arg8: memref<1x128xf32, #tpu.memory_space<vmem>>, %arg9: memref<1x128xf32, #tpu.memory_space<vmem>>, %arg10: memref<1x128xf32, #tpu.memory_space<vmem>>, %arg11: memref<1xf32, #tpu.memory_space<smem>>, %arg12: memref<1x1x8xf32, #tpu.memory_space<vmem>>) attributes {dimension_semantics = [#tpu.dimension_semantics<parallel>], iteration_bounds = array<i64: 2>, scalar_prefetch = 0 : i64, scratch_operands = 0 : i64, tpu.core_type = #tpu.core_type<tc>, window_params = [{transform_indices = @transform_0, window_bounds = array<i64: 1, 8, 32>}, {pipeline_mode = #tpu.pipeline_mode<synchronous>, transform_indices = @transform_1, window_bounds = array<i64: 3, 32, 128>}, {pipeline_mode = #tpu.pipeline_mode<synchronous>, transform_indices = @transform_2, window_bounds = array<i64: 1, 128>}, {pipeline_mode = #tpu.pipeline_mode<synchronous>, transform_indices = @transform_3, window_bounds = array<i64: 1, 128>}, {pipeline_mode = #tpu.pipeline_mode<synchronous>, transform_indices = @transform_4, window_bounds = array<i64: 1, 128>}, {pipeline_mode = #tpu.pipeline_mode<synchronous>, transform_indices = @transform_5, window_bounds = array<i64: 3, 128, 128>}, {pipeline_mode = #tpu.pipeline_mode<synchronous>, transform_indices = @transform_6, window_bounds = array<i64: 1, 128>}, {pipeline_mode = #tpu.pipeline_mode<synchronous>, transform_indices = @transform_7, window_bounds = array<i64: 1, 128>}, {pipeline_mode = #tpu.pipeline_mode<synchronous>, transform_indices = @transform_8, window_bounds = array<i64: 1, 128>}, {pipeline_mode = #tpu.pipeline_mode<synchronous>, transform_indices = @transform_9, window_bounds = array<i64: 1, 128>}, {transform_indices = @transform_10, window_bounds = array<i64: 1>}, {transform_indices = @transform_11, window_bounds = array<i64: 1, 1, 8>}]} {
    %c0 = arith.constant 0 : index
    %c0_0 = arith.constant 0 : index
    %c0_1 = arith.constant 0 : index
    %0 = vector.load %arg1[%c0, %c0_0, %c0_1] : memref<1x8x32xbf16, #tpu.memory_space<vmem>>, vector<1x8x32xbf16>
    %c0_2 = arith.constant 0 : index
    %c0_3 = arith.constant 0 : index
    %1 = vector.load %arg3[%c0_2, %c0_3] : memref<1x128xf32, #tpu.memory_space<vmem>>, vector<1x128xf32>
    %cst = arith.constant 0.000000e+00 : bf16
    %2 = vector.broadcast %cst : bf16 to vector<1x1x32xbf16>
    %3 = vector.extract_strided_slice %0 {offsets = [0, 0, 0], sizes = [1, 7, 32], strides = [1, 1, 1]} : vector<1x8x32xbf16> to vector<1x7x32xbf16>
    %4 = tpu.concatenate %2, %3 in 1 : vector<1x1x32xbf16>, vector<1x7x32xbf16> -> vector<1x8x32xbf16>
    %5 = vector.extract_strided_slice %0 {offsets = [0, 1, 0], sizes = [1, 7, 32], strides = [1, 1, 1]} : vector<1x8x32xbf16> to vector<1x7x32xbf16>
    %6 = tpu.concatenate %5, %2 in 1 : vector<1x7x32xbf16>, vector<1x1x32xbf16> -> vector<1x8x32xbf16>
    %7 = vector.shape_cast %4 : vector<1x8x32xbf16> to vector<8x32xbf16>
    %c0_4 = arith.constant 0 : index
    %c0_5 = arith.constant 0 : index
    %c0_6 = arith.constant 0 : index
    %8 = vector.load %arg2[%c0_4, %c0_5, %c0_6] : memref<3x32x128xbf16, #tpu.memory_space<vmem>>, vector<1x32x128xbf16>
    %9 = vector.shape_cast %8 : vector<1x32x128xbf16> to vector<32x128xbf16>
    %cst_7 = arith.constant dense<0.000000e+00> : vector<8x128xf32>
    %10 = tpu.matmul %7, %9, %cst_7 {dimension_numbers = #tpu.dot_dimension_numbers<[1], [0], [0], [1], [0, 0, 1, 1], [], []>} : vector<8x32xbf16>, vector<32x128xbf16>, vector<8x128xf32> -> vector<8x128xf32>
    %11 = vector.shape_cast %0 : vector<1x8x32xbf16> to vector<8x32xbf16>
    %c1 = arith.constant 1 : index
    %c0_8 = arith.constant 0 : index
    %c0_9 = arith.constant 0 : index
    %12 = vector.load %arg2[%c1, %c0_8, %c0_9] : memref<3x32x128xbf16, #tpu.memory_space<vmem>>, vector<1x32x128xbf16>
    %13 = vector.shape_cast %12 : vector<1x32x128xbf16> to vector<32x128xbf16>
    %cst_10 = arith.constant dense<0.000000e+00> : vector<8x128xf32>
    %14 = tpu.matmul %11, %13, %cst_10 {dimension_numbers = #tpu.dot_dimension_numbers<[1], [0], [0], [1], [0, 0, 1, 1], [], []>} : vector<8x32xbf16>, vector<32x128xbf16>, vector<8x128xf32> -> vector<8x128xf32>
    %15 = arith.addf %10, %14 : vector<8x128xf32>
    %16 = vector.shape_cast %6 : vector<1x8x32xbf16> to vector<8x32xbf16>
    %c2 = arith.constant 2 : index
    %c0_11 = arith.constant 0 : index
    %c0_12 = arith.constant 0 : index
    %17 = vector.load %arg2[%c2, %c0_11, %c0_12] : memref<3x32x128xbf16, #tpu.memory_space<vmem>>, vector<1x32x128xbf16>
    %18 = vector.shape_cast %17 : vector<1x32x128xbf16> to vector<32x128xbf16>
    %cst_13 = arith.constant dense<0.000000e+00> : vector<8x128xf32>
    %19 = tpu.matmul %16, %18, %cst_13 {dimension_numbers = #tpu.dot_dimension_numbers<[1], [0], [0], [1], [0, 0, 1, 1], [], []>} : vector<8x32xbf16>, vector<32x128xbf16>, vector<8x128xf32> -> vector<8x128xf32>
    %20 = arith.addf %15, %19 : vector<8x128xf32>
    %21 = vector.broadcast %1 : vector<1x128xf32> to vector<8x128xf32>
    %22 = arith.addf %20, %21 : vector<8x128xf32>
    %c0_14 = arith.constant 0 : index
    %c0_15 = arith.constant 0 : index
    %23 = vector.load %arg4[%c0_14, %c0_15] : memref<1x128xf32, #tpu.memory_space<vmem>>, vector<1x128xf32>
    %c0_16 = arith.constant 0 : index
    %c0_17 = arith.constant 0 : index
    %24 = vector.load %arg5[%c0_16, %c0_17] : memref<1x128xf32, #tpu.memory_space<vmem>>, vector<1x128xf32>
    %cst_18 = arith.constant dense<0.000000e+00> : vector<8xf32>
    %25 = vector.multi_reduction <add>, %22, %cst_18 [1] : vector<8x128xf32> to vector<8xf32>
    %26 = vector.shape_cast %25 : vector<8xf32> to vector<8x1xf32>
    %cst_19 = arith.constant 3.125000e-02 : f32
    %27 = vector.broadcast %cst_19 : f32 to vector<8x1xf32>
    %28 = arith.mulf %26, %27 : vector<8x1xf32>
    %29 = arith.mulf %22, %22 : vector<8x128xf32>
    %cst_20 = arith.constant dense<0.000000e+00> : vector<8xf32>
    %30 = vector.multi_reduction <add>, %29, %cst_20 [1] : vector<8x128xf32> to vector<8xf32>
    %31 = vector.shape_cast %30 : vector<8xf32> to vector<8x1xf32>
    %cst_21 = arith.constant 3.125000e-02 : f32
    %32 = vector.broadcast %cst_21 : f32 to vector<8x1xf32>
    %33 = arith.mulf %31, %32 : vector<8x1xf32>
    %34 = arith.mulf %28, %28 : vector<8x1xf32>
    %35 = arith.subf %33, %34 : vector<8x1xf32>
    %36 = vector.broadcast %28 : vector<8x1xf32> to vector<8x128xf32>
    %37 = arith.subf %22, %36 : vector<8x128xf32>
    %cst_22 = arith.constant 9.99999974E-6 : f32
    %38 = vector.broadcast %cst_22 : f32 to vector<8x1xf32>
    %39 = arith.addf %35, %38 : vector<8x1xf32>
    %40 = math.rsqrt %39 : vector<8x1xf32>
    %41 = vector.broadcast %40 : vector<8x1xf32> to vector<8x128xf32>
    %42 = arith.mulf %37, %41 : vector<8x128xf32>
    %43 = vector.broadcast %23 : vector<1x128xf32> to vector<8x128xf32>
    %44 = arith.mulf %42, %43 : vector<8x128xf32>
    %45 = vector.broadcast %24 : vector<1x128xf32> to vector<8x128xf32>
    %46 = arith.addf %44, %45 : vector<8x128xf32>
    %cst_23 = arith.constant 0.000000e+00 : f32
    %47 = vector.broadcast %cst_23 : f32 to vector<8x128xf32>
    %48 = arith.maximumf %46, %47 : vector<8x128xf32>
    %49 = arith.truncf %48 : vector<8x128xf32> to vector<8x128xbf16>
    %50 = vector.shape_cast %49 : vector<8x128xbf16> to vector<1x8x128xbf16>
    %c0_24 = arith.constant 0 : index
    %c0_25 = arith.constant 0 : index
    %51 = vector.load %arg7[%c0_24, %c0_25] : memref<1x128xf32, #tpu.memory_space<vmem>>, vector<1x128xf32>
    %cst_26 = arith.constant 0.000000e+00 : bf16
    %52 = vector.broadcast %cst_26 : bf16 to vector<1x1x128xbf16>
    %53 = vector.extract_strided_slice %50 {offsets = [0, 0, 0], sizes = [1, 7, 128], strides = [1, 1, 1]} : vector<1x8x128xbf16> to vector<1x7x128xbf16>
    %54 = tpu.concatenate %52, %53 in 1 : vector<1x1x128xbf16>, vector<1x7x128xbf16> -> vector<1x8x128xbf16>
    %55 = vector.extract_strided_slice %50 {offsets = [0, 1, 0], sizes = [1, 7, 128], strides = [1, 1, 1]} : vector<1x8x128xbf16> to vector<1x7x128xbf16>
    %56 = tpu.concatenate %55, %52 in 1 : vector<1x7x128xbf16>, vector<1x1x128xbf16> -> vector<1x8x128xbf16>
    %57 = vector.shape_cast %54 : vector<1x8x128xbf16> to vector<8x128xbf16>
    %c0_27 = arith.constant 0 : index
    %c0_28 = arith.constant 0 : index
    %c0_29 = arith.constant 0 : index
    %58 = vector.load %arg6[%c0_27, %c0_28, %c0_29] : memref<3x128x128xbf16, #tpu.memory_space<vmem>>, vector<1x128x128xbf16>
    %59 = vector.shape_cast %58 : vector<1x128x128xbf16> to vector<128x128xbf16>
    %cst_30 = arith.constant dense<0.000000e+00> : vector<8x128xf32>
    %60 = tpu.matmul %57, %59, %cst_30 {dimension_numbers = #tpu.dot_dimension_numbers<[1], [0], [0], [1], [0, 0, 1, 1], [], []>} : vector<8x128xbf16>, vector<128x128xbf16>, vector<8x128xf32> -> vector<8x128xf32>
    %61 = vector.shape_cast %50 : vector<1x8x128xbf16> to vector<8x128xbf16>
    %c1_31 = arith.constant 1 : index
    %c0_32 = arith.constant 0 : index
    %c0_33 = arith.constant 0 : index
    %62 = vector.load %arg6[%c1_31, %c0_32, %c0_33] : memref<3x128x128xbf16, #tpu.memory_space<vmem>>, vector<1x128x128xbf16>
    %63 = vector.shape_cast %62 : vector<1x128x128xbf16> to vector<128x128xbf16>
    %cst_34 = arith.constant dense<0.000000e+00> : vector<8x128xf32>
    %64 = tpu.matmul %61, %63, %cst_34 {dimension_numbers = #tpu.dot_dimension_numbers<[1], [0], [0], [1], [0, 0, 1, 1], [], []>} : vector<8x128xbf16>, vector<128x128xbf16>, vector<8x128xf32> -> vector<8x128xf32>
    %65 = arith.addf %60, %64 : vector<8x128xf32>
    %66 = vector.shape_cast %56 : vector<1x8x128xbf16> to vector<8x128xbf16>
    %c2_35 = arith.constant 2 : index
    %c0_36 = arith.constant 0 : index
    %c0_37 = arith.constant 0 : index
    %67 = vector.load %arg6[%c2_35, %c0_36, %c0_37] : memref<3x128x128xbf16, #tpu.memory_space<vmem>>, vector<1x128x128xbf16>
    %68 = vector.shape_cast %67 : vector<1x128x128xbf16> to vector<128x128xbf16>
    %cst_38 = arith.constant dense<0.000000e+00> : vector<8x128xf32>
    %69 = tpu.matmul %66, %68, %cst_38 {dimension_numbers = #tpu.dot_dimension_numbers<[1], [0], [0], [1], [0, 0, 1, 1], [], []>} : vector<8x128xbf16>, vector<128x128xbf16>, vector<8x128xf32> -> vector<8x128xf32>
    %70 = arith.addf %65, %69 : vector<8x128xf32>
    %71 = vector.broadcast %51 : vector<1x128xf32> to vector<8x128xf32>
    %72 = arith.addf %70, %71 : vector<8x128xf32>
    %c0_39 = arith.constant 0 : index
    %c0_40 = arith.constant 0 : index
    %73 = vector.load %arg8[%c0_39, %c0_40] : memref<1x128xf32, #tpu.memory_space<vmem>>, vector<1x128xf32>
    %c0_41 = arith.constant 0 : index
    %c0_42 = arith.constant 0 : index
    %74 = vector.load %arg9[%c0_41, %c0_42] : memref<1x128xf32, #tpu.memory_space<vmem>>, vector<1x128xf32>
    %cst_43 = arith.constant dense<0.000000e+00> : vector<8xf32>
    %75 = vector.multi_reduction <add>, %72, %cst_43 [1] : vector<8x128xf32> to vector<8xf32>
    %76 = vector.shape_cast %75 : vector<8xf32> to vector<8x1xf32>
    %cst_44 = arith.constant 3.125000e-02 : f32
    %77 = vector.broadcast %cst_44 : f32 to vector<8x1xf32>
    %78 = arith.mulf %76, %77 : vector<8x1xf32>
    %79 = arith.mulf %72, %72 : vector<8x128xf32>
    %cst_45 = arith.constant dense<0.000000e+00> : vector<8xf32>
    %80 = vector.multi_reduction <add>, %79, %cst_45 [1] : vector<8x128xf32> to vector<8xf32>
    %81 = vector.shape_cast %80 : vector<8xf32> to vector<8x1xf32>
    %cst_46 = arith.constant 3.125000e-02 : f32
    %82 = vector.broadcast %cst_46 : f32 to vector<8x1xf32>
    %83 = arith.mulf %81, %82 : vector<8x1xf32>
    %84 = arith.mulf %78, %78 : vector<8x1xf32>
    %85 = arith.subf %83, %84 : vector<8x1xf32>
    %86 = vector.broadcast %78 : vector<8x1xf32> to vector<8x128xf32>
    %87 = arith.subf %72, %86 : vector<8x128xf32>
    %cst_47 = arith.constant 9.99999974E-6 : f32
    %88 = vector.broadcast %cst_47 : f32 to vector<8x1xf32>
    %89 = arith.addf %85, %88 : vector<8x1xf32>
    %90 = math.rsqrt %89 : vector<8x1xf32>
    %91 = vector.broadcast %90 : vector<8x1xf32> to vector<8x128xf32>
    %92 = arith.mulf %87, %91 : vector<8x128xf32>
    %93 = vector.broadcast %73 : vector<1x128xf32> to vector<8x128xf32>
    %94 = arith.mulf %92, %93 : vector<8x128xf32>
    %95 = vector.broadcast %74 : vector<1x128xf32> to vector<8x128xf32>
    %96 = arith.addf %94, %95 : vector<8x128xf32>
    %cst_48 = arith.constant 0.000000e+00 : f32
    %97 = vector.broadcast %cst_48 : f32 to vector<8x128xf32>
    %98 = arith.maximumf %96, %97 : vector<8x128xf32>
    %99 = vector.shape_cast %98 : vector<8x128xf32> to vector<1x8x128xf32>
    %c0_49 = arith.constant 0 : index
    %c0_50 = arith.constant 0 : index
    %100 = vector.load %arg10[%c0_49, %c0_50] : memref<1x128xf32, #tpu.memory_space<vmem>>, vector<1x128xf32>
    %101 = vector.shape_cast %100 : vector<1x128xf32> to vector<1x1x128xf32>
    %102 = vector.broadcast %101 : vector<1x1x128xf32> to vector<1x8x128xf32>
    %103 = arith.mulf %99, %102 : vector<1x8x128xf32>
    %cst_51 = arith.constant dense<0.000000e+00> : vector<1x8xf32>
    %104 = vector.multi_reduction <add>, %103, %cst_51 [2] : vector<1x8x128xf32> to vector<1x8xf32>
    %c0_52 = arith.constant 0 : index
    %105 = memref.load %arg11[%c0_52] : memref<1xf32, #tpu.memory_space<smem>>
    %106 = vector.broadcast %105 : f32 to vector<1x8xf32>
    %107 = arith.addf %104, %106 : vector<1x8xf32>
    %108 = vector.shape_cast %107 : vector<1x8xf32> to vector<1x1x8xf32>
    %c0_53 = arith.constant 0 : index
    %c0_54 = arith.constant 0 : index
    %c0_55 = arith.constant 0 : index
    %109 = vector.load %arg12[%c0_53, %c0_54, %c0_55] : memref<1x1x8xf32, #tpu.memory_space<vmem>>, vector<1x1x8xf32>
    tpu.vector_store %arg12[%c0_53, %c0_54, %c0_55], %108 {strides = array<i32>} : memref<1x1x8xf32, #tpu.memory_space<vmem>>, vector<1x1x8xf32>,
    return
  }
  func.func @transform_0(%arg0: i32) -> (i32, i32, i32) {
    %c0_i32 = arith.constant 0 : i32
    %c0_i32_0 = arith.constant 0 : i32
    %c0_i32_1 = arith.constant 0 : i32
    return %arg0, %c0_i32, %c0_i32_0 : i32, i32, i32
  }
  func.func @transform_1(%arg0: i32) -> (i32, i32, i32) {
    %c0_i32 = arith.constant 0 : i32
    %c0_i32_0 = arith.constant 0 : i32
    %c0_i32_1 = arith.constant 0 : i32
    %c0_i32_2 = arith.constant 0 : i32
    return %c0_i32, %c0_i32_0, %c0_i32_1 : i32, i32, i32
  }
  func.func @transform_2(%arg0: i32) -> (i32, i32) {
    %c0_i32 = arith.constant 0 : i32
    %c0_i32_0 = arith.constant 0 : i32
    %c0_i32_1 = arith.constant 0 : i32
    return %c0_i32, %c0_i32_0 : i32, i32
  }
  func.func @transform_3(%arg0: i32) -> (i32, i32) {
    %c0_i32 = arith.constant 0 : i32
    %c0_i32_0 = arith.constant 0 : i32
    %c0_i32_1 = arith.constant 0 : i32
    return %c0_i32, %c0_i32_0 : i32, i32
  }
  func.func @transform_4(%arg0: i32) -> (i32, i32) {
    %c0_i32 = arith.constant 0 : i32
    %c0_i32_0 = arith.constant 0 : i32
    %c0_i32_1 = arith.constant 0 : i32
    return %c0_i32, %c0_i32_0 : i32, i32
  }
  func.func @transform_5(%arg0: i32) -> (i32, i32, i32) {
    %c0_i32 = arith.constant 0 : i32
    %c0_i32_0 = arith.constant 0 : i32
    %c0_i32_1 = arith.constant 0 : i32
    %c0_i32_2 = arith.constant 0 : i32
    return %c0_i32, %c0_i32_0, %c0_i32_1 : i32, i32, i32
  }
  func.func @transform_6(%arg0: i32) -> (i32, i32) {
    %c0_i32 = arith.constant 0 : i32
    %c0_i32_0 = arith.constant 0 : i32
    %c0_i32_1 = arith.constant 0 : i32
    return %c0_i32, %c0_i32_0 : i32, i32
  }
  func.func @transform_7(%arg0: i32) -> (i32, i32) {
    %c0_i32 = arith.constant 0 : i32
    %c0_i32_0 = arith.constant 0 : i32
    %c0_i32_1 = arith.constant 0 : i32
    return %c0_i32, %c0_i32_0 : i32, i32
  }
  func.func @transform_8(%arg0: i32) -> (i32, i32) {
    %c0_i32 = arith.constant 0 : i32
    %c0_i32_0 = arith.constant 0 : i32
    %c0_i32_1 = arith.constant 0 : i32
    return %c0_i32, %c0_i32_0 : i32, i32
  }
  func.func @transform_9(%arg0: i32) -> (i32, i32) {
    %c0_i32 = arith.constant 0 : i32
    %c0_i32_0 = arith.constant 0 : i32
    %c0_i32_1 = arith.constant 0 : i32
    return %c0_i32, %c0_i32_0 : i32, i32
  }
  func.func @transform_10(%arg0: i32) -> i32 {
    %c0_i32 = arith.constant 0 : i32
    %c0_i32_0 = arith.constant 0 : i32
    return %c0_i32 : i32
  }
  func.func @transform_11(%arg0: i32) -> (i32, i32, i32) {
    %c0_i32 = arith.constant 0 : i32
    %c0_i32_0 = arith.constant 0 : i32
    %c0_i32_1 = arith.constant 0 : i32
    return %arg0, %c0_i32, %c0_i32_0 : i32, i32, i32
  }
}

</mosaic_0001>

<llo_original>
// kernel: tpu_custom_call.1
$region0: #{tpu_custom_call.1}
  #allocation0 [shape = 'u32[]', space=smem, size = 0x4, offset = 0x4, fixed_abs, tag = 'smem constant byte address 0x4 - core index']
  #allocation1 [shape = 'u32[144,128]{1,0:T(1,128)}', space=vmem, size = 0x12000, scoped, tag = 'internal scratch']
  #allocation2 [shape = 'f32[1]{0:T(128)S(6)}', space=smem, size = 0x200, scoped, tag = 'scoped memory for tpu_custom_call.1']
  %s0 = inlined_call_operand.hbm [shape: bf16[2,8,32], index: 0, kind: input, shape index: {}]
  %s1 = inlined_call_operand.hbm [shape: bf16[3,32,128], index: 1, kind: input, shape index: {}]
  %s2 = inlined_call_operand.vmem [shape: f32[1,128], index: 2, kind: input, shape index: {}]
  %s3 = inlined_call_operand.vmem [shape: f32[1,128], index: 3, kind: input, shape index: {}]
  %s4 = inlined_call_operand.vmem [shape: f32[1,128], index: 4, kind: input, shape index: {}]
  %s5 = inlined_call_operand.hbm [shape: bf16[3,128,128], index: 5, kind: input, shape index: {}]
  %s6 = inlined_call_operand.vmem [shape: f32[1,128], index: 6, kind: input, shape index: {}]
  %s7 = inlined_call_operand.vmem [shape: f32[1,128], index: 7, kind: input, shape index: {}]
  %s8 = inlined_call_operand.vmem [shape: f32[1,128], index: 8, kind: input, shape index: {}]
  %s9 = inlined_call_operand.vmem [shape: f32[1,128], index: 9, kind: input, shape index: {}]
  %s10 = inlined_call_operand.<no memory space> [shape: f32[1], index: 10, kind: input, shape index: {}]
  %s11 = inlined_call_operand.hbm [shape: f32[2,1,8], index: 11, kind: output, shape index: {}]
  %s12 = sld [smem:[#allocation0]]
  $region89: #{tpu_custom_call.1} parent=0
    _
  %s14 = ssub.s32 1, %s12
  %s15 = scalar_select 0, %s14, %s12
  %16 = sst [smem:[#allocation2]] %s10
  $region1: #{tpu_custom_call.1} parent=0
    #allocation3 [shape = 'u8[4096]{0}', space=vmem, size = 0x1000, scoped, tag = 'input window, operand 0']
    #allocation4 [shape = 's32[2]{0}', space=sflag, size = 0x8, scoped, tag = 'scoped memory for tpu_custom_call.1']
    #allocation5 [shape = 's32[2]{0}', space=sflag, size = 0x8, scoped, tag = 'scoped memory for tpu_custom_call.1']
    #allocation6 [shape = 'u8[24576]{0}', space=vmem, size = 0x6000, scoped, tag = 'input window, operand 1, single buffered']
    #allocation7 [shape = 's32[1]{0}', space=sflag, size = 0x4, scoped, tag = 'scoped memory for tpu_custom_call.1']
    #allocation8 [shape = 'u8[98304]{0}', space=vmem, size = 0x18000, scoped, tag = 'input window, operand 5, single buffered']
    #allocation9 [shape = 'u8[1024]{0}', space=vmem, size = 0x400, scoped, tag = 'output window, operand 0']
    %17 = vsyncpa [#allocation4], 0
    %s18 = scalar_lea.sflag [#allocation4], 1
    %19 = vsyncpa %s18, 0
    %20 = vsyncpa [#allocation7], 0
    %21 = vsyncpa [#allocation5], 0
    %s22 = scalar_lea.sflag [#allocation5], 1
    %23 = vsyncpa %s22, 0
    loop: start=0, step=1, limit=4
    $region2: #{tpu_custom_call.1} parent=1 // loop_pre_header
      _
    $region3: #{tpu_custom_call.1} parent=1 // loop_header
      %s25 = sphi 0, %s29
      %p26 = scmp.ge.s32.totalorder %s25, 4
      %s35 = sphi 0, %s37
      %s38 = sphi 0, %s35
      %s39 = sphi 0, %s38
      %s55 = sphi 0, %s39
      %s59 = sphi 0, %s59
      %s61 = sphi 0, %s59
      %s62 = sphi 0, %s61
      %s76 = sphi 0, %s62
      %s80 = sphi 0, %s80
      %s82 = sphi 0, %s80
      %s83 = sphi 0, %s82
      %s97 = sphi 0, %s83
      %s101 = sphi 0, %s101
      %s103 = sphi 0, %s101
      %s104 = sphi 0, %s103
      %s118 = sphi 0, %s104
      %s122 = sphi 0, %s122
      %s124 = sphi 0, %s122
      %s125 = sphi 0, %s124
      %s139 = sphi 0, %s125
      %s143 = sphi 0, %s143
      %s145 = sphi 0, %s143
      %s146 = sphi 0, %s145
      %s160 = sphi 0, %s146
      %s164 = sphi 0, %s164
      %s166 = sphi 0, %s164
      %s167 = sphi 0, %s166
      %s181 = sphi 0, %s167
      %s185 = sphi 0, %s185
      %s187 = sphi 0, %s185
      %s188 = sphi 0, %s187
      %s202 = sphi 0, %s188
      %s206 = sphi 0, %s206
      %s208 = sphi 0, %s206
      %s209 = sphi 0, %s208
      %s223 = sphi 0, %s209
      %s227 = sphi 0, %s227
      %s229 = sphi 0, %s227
      %s230 = sphi 0, %s229
      %s244 = sphi 0, %s230
      %s248 = sphi 0, %s248
      %s250 = sphi 0, %s248
      %s251 = sphi 0, %s250
      %s265 = sphi 0, %s251
      %s271 = sphi 0, %s273
      %s274 = sphi 0, %s271
      %s275 = sphi 0, %s274
      %s291 = sphi 0, %s275
    $region4: #{tpu_custom_call.1} parent=1 // loop_header_branch
      %28 = sbr.rel (%p26) target = $region8
    $region5: #{tpu_custom_call.1} parent=1 // loop_body
      %s30 = ssub.s32 %s25, 1
      %s31 = ssub.s32 %s25, 2
      %s32 = sadd.s32 %s25, 1
      %s33 = ssub.s32 %s25, %s32
      %p34 = scmp.eq.s32.totalorder %s33, 0
      %s36 = sadd.s32 %s35, 1
      %s37 = scalar_select %p34, %s35, %s36
      %p40 = pneg %p34
      %p41 = scmp.eq.s32.totalorder %s25, 1
      %p42 = por %p40, %p41
      %p43 = scmp.ne.s32.totalorder %s35, %s38
      %p44 = scmp.eq.s32.totalorder %s25, 0
      %p45 = por %p43, %p44
      %p46 = scmp.ne.s32.totalorder %s35, %s38
      %p47 = scmp.eq.s32.totalorder %s30, 1
      %p48 = por %p46, %p47
      %p49 = scmp.ne.s32.totalorder %s38, %s39
      %p50 = scmp.eq.s32.totalorder %s30, 0
      %p51 = por %p49, %p50
      %p52 = scmp.ne.s32.totalorder %s38, %s39
      %p53 = scmp.eq.s32.totalorder %s31, 1
      %p54 = por %p52, %p53
      %p56 = scmp.ne.s32.totalorder %s39, %s55
      %p57 = scmp.eq.s32.totalorder %s31, 0
      %p58 = por %p56, %p57
      %s60 = sadd.s32 %s59, 1
      %p63 = scmp.eq.s32.totalorder %s25, 1
      %p64 = scmp.ne.s32.totalorder %s59, %s61
      %p65 = scmp.eq.s32.totalorder %s25, 0
      %p66 = por %p64, %p65
      %p67 = scmp.ne.s32.totalorder %s59, %s61
      %p68 = scmp.eq.s32.totalorder %s30, 1
      %p69 = por %p67, %p68
      %p70 = scmp.ne.s32.totalorder %s61, %s62
      %p71 = scmp.eq.s32.totalorder %s30, 0
      %p72 = por %p70, %p71
      %p73 = scmp.ne.s32.totalorder %s61, %s62
      %p74 = scmp.eq.s32.totalorder %s31, 1
      %p75 = por %p73, %p74
      %p77 = scmp.ne.s32.totalorder %s62, %s76
      %p78 = scmp.eq.s32.totalorder %s31, 0
      %p79 = por %p77, %p78
      %s81 = sadd.s32 %s80, 1
      %p84 = scmp.eq.s32.totalorder %s25, 1
      %p85 = scmp.ne.s32.totalorder %s80, %s82
      %p86 = scmp.eq.s32.totalorder %s25, 0
      %p87 = por %p85, %p86
      %p88 = scmp.ne.s32.totalorder %s80, %s82
      %p89 = scmp.eq.s32.totalorder %s30, 1
      %p90 = por %p88, %p89
      %p91 = scmp.ne.s32.totalorder %s82, %s83
      %p92 = scmp.eq.s32.totalorder %s30, 0
      %p93 = por %p91, %p92
      %p94 = scmp.ne.s32.totalorder %s82, %s83
      %p95 = scmp.eq.s32.totalorder %s31, 1
      %p96 = por %p94, %p95
      %p98 = scmp.ne.s32.totalorder %s83, %s97
      %p99 = scmp.eq.s32.totalorder %s31, 0
      %p100 = por %p98, %p99
      %s102 = sadd.s32 %s101, 1
      %p105 = scmp.eq.s32.totalorder %s25, 1
      %p106 = scmp.ne.s32.totalorder %s101, %s103
      %p107 = scmp.eq.s32.totalorder %s25, 0
      %p108 = por %p106, %p107
      %p109 = scmp.ne.s32.totalorder %s101, %s103
      %p110 = scmp.eq.s32.totalorder %s30, 1
      %p111 = por %p109, %p110
      %p112 = scmp.ne.s32.totalorder %s103, %s104
      %p113 = scmp.eq.s32.totalorder %s30, 0
      %p114 = por %p112, %p113
      %p115 = scmp.ne.s32.totalorder %s103, %s104
      %p116 = scmp.eq.s32.totalorder %s31, 1
      %p117 = por %p115, %p116
      %p119 = scmp.ne.s32.totalorder %s104, %s118
      %p120 = scmp.eq.s32.totalorder %s31, 0
      %p121 = por %p119, %p120
      %s123 = sadd.s32 %s122, 1
      %p126 = scmp.eq.s32.totalorder %s25, 1
      %p127 = scmp.ne.s32.totalorder %s122, %s124
      %p128 = scmp.eq.s32.totalorder %s25, 0
      %p129 = por %p127, %p128
      %p130 = scmp.ne.s32.totalorder %s122, %s124
      %p131 = scmp.eq.s32.totalorder %s30, 1
      %p132 = por %p130, %p131
      %p133 = scmp.ne.s32.totalorder %s124, %s125
      %p134 = scmp.eq.s32.totalorder %s30, 0
      %p135 = por %p133, %p134
      %p136 = scmp.ne.s32.totalorder %s124, %s125
      %p137 = scmp.eq.s32.totalorder %s31, 1
      %p138 = por %p136, %p137
      %p140 = scmp.ne.s32.totalorder %s125, %s139
      %p141 = scmp.eq.s32.totalorder %s31, 0
      %p142 = por %p140, %p141
      %s144 = sadd.s32 %s143, 1
      %p147 = scmp.eq.s32.totalorder %s25, 1
      %p148 = scmp.ne.s32.totalorder %s143, %s145
      %p149 = scmp.eq.s32.totalorder %s25, 0
      %p150 = por %p148, %p149
      %p151 = scmp.ne.s32.totalorder %s143, %s145
      %p152 = scmp.eq.s32.totalorder %s30, 1
      %p153 = por %p151, %p152
      %p154 = scmp.ne.s32.totalorder %s145, %s146
      %p155 = scmp.eq.s32.totalorder %s30, 0
      %p156 = por %p154, %p155
      %p157 = scmp.ne.s32.totalorder %s145, %s146
      %p158 = scmp.eq.s32.totalorder %s31, 1
      %p159 = por %p157, %p158
      %p161 = scmp.ne.s32.totalorder %s146, %s160
      %p162 = scmp.eq.s32.totalorder %s31, 0
      %p163 = por %p161, %p162
      %s165 = sadd.s32 %s164, 1
      %p168 = scmp.eq.s32.totalorder %s25, 1
      %p169 = scmp.ne.s32.totalorder %s164, %s166
      %p170 = scmp.eq.s32.totalorder %s25, 0
      %p171 = por %p169, %p170
      %p172 = scmp.ne.s32.totalorder %s164, %s166
      %p173 = scmp.eq.s32.totalorder %s30, 1
      %p174 = por %p172, %p173
      %p175 = scmp.ne.s32.totalorder %s166, %s167
      %p176 = scmp.eq.s32.totalorder %s30, 0
      %p177 = por %p175, %p176
      %p178 = scmp.ne.s32.totalorder %s166, %s167
      %p179 = scmp.eq.s32.totalorder %s31, 1
      %p180 = por %p178, %p179
      %p182 = scmp.ne.s32.totalorder %s167, %s181
      %p183 = scmp.eq.s32.totalorder %s31, 0
      %p184 = por %p182, %p183
      %s186 = sadd.s32 %s185, 1
      %p189 = scmp.eq.s32.totalorder %s25, 1
      %p190 = scmp.ne.s32.totalorder %s185, %s187
      %p191 = scmp.eq.s32.totalorder %s25, 0
      %p192 = por %p190, %p191
      %p193 = scmp.ne.s32.totalorder %s185, %s187
      %p194 = scmp.eq.s32.totalorder %s30, 1
      %p195 = por %p193, %p194
      %p196 = scmp.ne.s32.totalorder %s187, %s188
      %p197 = scmp.eq.s32.totalorder %s30, 0
      %p198 = por %p196, %p197
      %p199 = scmp.ne.s32.totalorder %s187, %s188
      %p200 = scmp.eq.s32.totalorder %s31, 1
      %p201 = por %p199, %p200
      %p203 = scmp.ne.s32.totalorder %s188, %s202
      %p204 = scmp.eq.s32.totalorder %s31, 0
      %p205 = por %p203, %p204
      %s207 = sadd.s32 %s206, 1
      %p210 = scmp.eq.s32.totalorder %s25, 1
      %p211 = scmp.ne.s32.totalorder %s206, %s208
      %p212 = scmp.eq.s32.totalorder %s25, 0
      %p213 = por %p211, %p212
      %p214 = scmp.ne.s32.totalorder %s206, %s208
      %p215 = scmp.eq.s32.totalorder %s30, 1
      %p216 = por %p214, %p215
      %p217 = scmp.ne.s32.totalorder %s208, %s209
      %p218 = scmp.eq.s32.totalorder %s30, 0
      %p219 = por %p217, %p218
      %p220 = scmp.ne.s32.totalorder %s208, %s209
      %p221 = scmp.eq.s32.totalorder %s31, 1
      %p222 = por %p220, %p221
      %p224 = scmp.ne.s32.totalorder %s209, %s223
      %p225 = scmp.eq.s32.totalorder %s31, 0
      %p226 = por %p224, %p225
      %s228 = sadd.s32 %s227, 1
      %p231 = scmp.eq.s32.totalorder %s25, 1
      %p232 = scmp.ne.s32.totalorder %s227, %s229
      %p233 = scmp.eq.s32.totalorder %s25, 0
      %p234 = por %p232, %p233
      %p235 = scmp.ne.s32.totalorder %s227, %s229
      %p236 = scmp.eq.s32.totalorder %s30, 1
      %p237 = por %p235, %p236
      %p238 = scmp.ne.s32.totalorder %s229, %s230
      %p239 = scmp.eq.s32.totalorder %s30, 0
      %p240 = por %p238, %p239
      %p241 = scmp.ne.s32.totalorder %s229, %s230
      %p242 = scmp.eq.s32.totalorder %s31, 1
      %p243 = por %p241, %p242
      %p245 = scmp.ne.s32.totalorder %s230, %s244
      %p246 = scmp.eq.s32.totalorder %s31, 0
      %p247 = por %p245, %p246
      %s249 = sadd.s32 %s248, 1
      %p252 = scmp.eq.s32.totalorder %s25, 1
      %p253 = scmp.ne.s32.totalorder %s248, %s250
      %p254 = scmp.eq.s32.totalorder %s25, 0
      %p255 = por %p253, %p254
      %p256 = scmp.ne.s32.totalorder %s248, %s250
      %p257 = scmp.eq.s32.totalorder %s30, 1
      %p258 = por %p256, %p257
      %p259 = scmp.ne.s32.totalorder %s250, %s251
      %p260 = scmp.eq.s32.totalorder %s30, 0
      %p261 = por %p259, %p260
      %p262 = scmp.ne.s32.totalorder %s250, %s251
      %p263 = scmp.eq.s32.totalorder %s31, 1
      %p264 = por %p262, %p263
      %p266 = scmp.ne.s32.totalorder %s251, %s265
      %p267 = scmp.eq.s32.totalorder %s31, 0
      %p268 = por %p266, %p267
      %s269 = ssub.s32 %s25, %s32
      %p270 = scmp.eq.s32.totalorder %s269, 0
      %s272 = sadd.s32 %s271, 1
      %s273 = scalar_select %p270, %s271, %s272
      %p276 = pneg %p270
      %p277 = scmp.eq.s32.totalorder %s25, 1
      %p278 = por %p276, %p277
      %p279 = scmp.ne.s32.totalorder %s271, %s274
      %p280 = scmp.eq.s32.totalorder %s25, 0
      %p281 = por %p279, %p280
      %p282 = scmp.ne.s32.totalorder %s271, %s274
      %p283 = scmp.eq.s32.totalorder %s30, 1
      %p284 = por %p282, %p283
      %p285 = scmp.ne.s32.totalorder %s274, %s275
      %p286 = scmp.eq.s32.totalorder %s30, 0
      %p287 = por %p285, %p286
      %p288 = scmp.ne.s32.totalorder %s274, %s275
      %p289 = scmp.eq.s32.totalorder %s31, 1
      %p290 = por %p288, %p289
      %p292 = scmp.ne.s32.totalorder %s275, %s291
      %p293 = scmp.eq.s32.totalorder %s31, 0
      %p294 = por %p292, %p293
      %p295 = scmp.le.s32.totalorder 1, %s25
      %p296 = scmp.lt.s32.totalorder %s25, 3
      %p297 = pnand %p295, %p296
      %p298 = pneg %p297
      // Predicated region
      $region9: #{tpu_custom_call.1} parent=5 // pred_check
        _
      $region10: #{tpu_custom_call.1} parent=5 // pred_check_branch
        %300 = sbr.rel (%p297) target = $region12
      $region11: #{tpu_custom_call.1} parent=5 // pred_region
        %s301 = ssub.s32 %s25, 1
        // Predicated region
        $region13: #{tpu_custom_call.1} parent=11 // pred_check
          %p302 = pneg %p72
        $region14: #{tpu_custom_call.1} parent=11 // pred_check_branch
          %304 = sbr.rel (%p302) target = $region16
        $region15: #{tpu_custom_call.1} parent=11 // pred_region
          %s306 = ssub.s32 768, 768
          %307 = vsyncadd [#allocation7], %s306
          %s308 = sshll.u32 [#allocation6], 4
          %s309 = int_to_ptr.vmem [resolvable:$true] %s308
          %314 = dma.hbm_to_vmem [thread:$0]  %s1, 768, %s309, [#allocation7], 64, 64, 4
        $region16: #{tpu_custom_call.1} parent=11 // pred_fallthru
          _
        // Predicated region
        $region17: #{tpu_custom_call.1} parent=11 // pred_check
          %p315 = pneg %p93
        $region18: #{tpu_custom_call.1} parent=11 // pred_check_branch
          %317 = sbr.rel (%p315) target = $region20
        $region19: #{tpu_custom_call.1} parent=11 // pred_region
          _
        $region20: #{tpu_custom_call.1} parent=11 // pred_fallthru
          _
        // Predicated region
        $region21: #{tpu_custom_call.1} parent=11 // pred_check
          %p318 = pneg %p114
        $region22: #{tpu_custom_call.1} parent=11 // pred_check_branch
          %320 = sbr.rel (%p318) target = $region24
        $region23: #{tpu_custom_call.1} parent=11 // pred_region
          _
        $region24: #{tpu_custom_call.1} parent=11 // pred_fallthru
          _
        // Predicated region
        $region25: #{tpu_custom_call.1} parent=11 // pred_check
          %p321 = pneg %p135
        $region26: #{tpu_custom_call.1} parent=11 // pred_check_branch
          %323 = sbr.rel (%p321) target = $region28
        $region27: #{tpu_custom_call.1} parent=11 // pred_region
          _
        $region28: #{tpu_custom_call.1} parent=11 // pred_fallthru
          _
        // Predicated region
        $region29: #{tpu_custom_call.1} parent=11 // pred_check
          %p324 = pneg %p156
        $region30: #{tpu_custom_call.1} parent=11 // pred_check_branch
          %326 = sbr.rel (%p324) target = $region32
        $region31: #{tpu_custom_call.1} parent=11 // pred_region
          %s328 = ssub.s32 3072, 3072
          %329 = vsyncadd [#allocation7], %s328
          %s330 = sshll.u32 [#allocation8], 4
          %s331 = int_to_ptr.vmem [resolvable:$true] %s330
          %336 = dma.hbm_to_vmem [thread:$0]  %s5, 3072, %s331, [#allocation7], 64, 64, 4
        $region32: #{tpu_custom_call.1} parent=11 // pred_fallthru
          _
        // Predicated region
        $region33: #{tpu_custom_call.1} parent=11 // pred_check
          %p337 = pneg %p177
        $region34: #{tpu_custom_call.1} parent=11 // pred_check_branch
          %339 = sbr.rel (%p337) target = $region36
        $region35: #{tpu_custom_call.1} parent=11 // pred_region
          _
        $region36: #{tpu_custom_call.1} parent=11 // pred_fallthru
          _
        // Predicated region
        $region37: #{tpu_custom_call.1} parent=11 // pred_check
          %p340 = pneg %p198
        $region38: #{tpu_custom_call.1} parent=11 // pred_check_branch
          %342 = sbr.rel (%p340) target = $region40
        $region39: #{tpu_custom_call.1} parent=11 // pred_region
          _
        $region40: #{tpu_custom_call.1} parent=11 // pred_fallthru
          _
        // Predicated region
        $region41: #{tpu_custom_call.1} parent=11 // pred_check
          %p343 = pneg %p219
        $region42: #{tpu_custom_call.1} parent=11 // pred_check_branch
          %345 = sbr.rel (%p343) target = $region44
        $region43: #{tpu_custom_call.1} parent=11 // pred_region
          _
        $region44: #{tpu_custom_call.1} parent=11 // pred_fallthru
          _
        // Predicated region
        $region45: #{tpu_custom_call.1} parent=11 // pred_check
          %p346 = pneg %p240
        $region46: #{tpu_custom_call.1} parent=11 // pred_check_branch
          %348 = sbr.rel (%p346) target = $region48
        $region47: #{tpu_custom_call.1} parent=11 // pred_region
          _
        $region48: #{tpu_custom_call.1} parent=11 // pred_fallthru
          _
        // Predicated region
        $region49: #{tpu_custom_call.1} parent=11 // pred_check
          %p349 = pneg %p261
        $region50: #{tpu_custom_call.1} parent=11 // pred_check_branch
          %351 = sbr.rel (%p349) target = $region52
        $region51: #{tpu_custom_call.1} parent=11 // pred_region
          _
        $region52: #{tpu_custom_call.1} parent=11 // pred_fallthru
          _
      $region12: #{tpu_custom_call.1} parent=5 // pred_fallthru
        _
      %p352 = scmp.lt.s32.totalorder %s25, 2
      // Predicated region
      $region53: #{tpu_custom_call.1} parent=5 // pred_check
        %p353 = pneg %p352
      $region54: #{tpu_custom_call.1} parent=5 // pred_check_branch
        %355 = sbr.rel (%p353) target = $region56
      $region55: #{tpu_custom_call.1} parent=5 // pred_region
        // Predicated region
        $region57: #{tpu_custom_call.1} parent=55 // pred_check
          %p356 = pneg %p45
        $region58: #{tpu_custom_call.1} parent=55 // pred_check_branch
          %358 = sbr.rel (%p356) target = $region60
        $region59: #{tpu_custom_call.1} parent=55 // pred_region
          %s359 = sand.u32 %s35, 1
          %s360 = scalar_lea.sflag [#allocation4], %s359
          %s361 = sand.u32 %s35, 1
          %s362 = smul.addr %s361, 4
          %s363 = scalar_lea.vmem [#allocation3], %s362
          %s365 = ssub.s32 64, 64
          %366 = vsyncadd %s360, %s365
          %s367 = smul.addr %s25, 64
          %s368 = scalar_lea.hbm %s0, %s367
          %s370 = sshll.u32 %s363, 4
          %s371 = int_to_ptr.vmem [resolvable:$true] %s370
          %373 = dma.hbm_to_vmem [thread:$0]  %s368, 64, %s371, %s360
        $region60: #{tpu_custom_call.1} parent=55 // pred_fallthru
          _
      $region56: #{tpu_custom_call.1} parent=5 // pred_fallthru
        _
      %p374 = scmp.le.s32.totalorder 1, %s25
      %p375 = scmp.lt.s32.totalorder %s25, 3
      %p376 = pnand %p374, %p375
      %p377 = pneg %p376
      // Predicated region
      $region61: #{tpu_custom_call.1} parent=5 // pred_check
        _
      $region62: #{tpu_custom_call.1} parent=5 // pred_check_branch
        %379 = sbr.rel (%p376) target = $region64
      $region63: #{tpu_custom_call.1} parent=5 // pred_region
        %s380 = ssub.s32 %s25, 1
        %s381 = sand.u32 %s38, 1
        %s382 = scalar_lea.sflag [#allocation4], %s381
        %s383 = sand.u32 %s38, 1
        %s384 = smul.addr %s383, 4
        %s385 = scalar_lea.vmem [#allocation3], %s384
        // Predicated region
        $region65: #{tpu_custom_call.1} parent=63 // pred_check
          %p386 = pneg %p51
        $region66: #{tpu_custom_call.1} parent=63 // pred_check_branch
          %388 = sbr.rel (%p386) target = $region68
        $region67: #{tpu_custom_call.1} parent=63 // pred_region
          %389 = dma.done %s382, 64
        $region68: #{tpu_custom_call.1} parent=63 // pred_fallthru
          _
        // Predicated region
        $region69: #{tpu_custom_call.1} parent=63 // pred_check
          %p390 = pneg %p72
        $region70: #{tpu_custom_call.1} parent=63 // pred_check_branch
          %392 = sbr.rel (%p390) target = $region72
        $region71: #{tpu_custom_call.1} parent=63 // pred_region
          %393 = dma.done [#allocation7], 768
        $region72: #{tpu_custom_call.1} parent=63 // pred_fallthru
          _
        // Predicated region
        $region73: #{tpu_custom_call.1} parent=63 // pred_check
          %p394 = pneg %p156
        $region74: #{tpu_custom_call.1} parent=63 // pred_check_branch
          %396 = sbr.rel (%p394) target = $region76
        $region75: #{tpu_custom_call.1} parent=63 // pred_region
          %397 = dma.done [#allocation7], 3072
        $region76: #{tpu_custom_call.1} parent=63 // pred_fallthru
          _
        %s398 = sand.u32 %s38, 1
        %s399 = scalar_lea.sflag [#allocation4], %s398
        %s400 = sand.u32 %s38, 1
        %s401 = smul.addr %s400, 4
        %s402 = scalar_lea.vmem [#allocation3], %s401
        %p403 = pneg %p51
        %p404 = pneg %p48
        %p405 = pneg %p72
        %p406 = pneg %p69
        %p407 = pneg %p93
        %p408 = pneg %p90
        %p409 = pneg %p114
        %p410 = pneg %p111
        %p411 = pneg %p135
        %p412 = pneg %p132
        %p413 = pneg %p156
        %p414 = pneg %p153
        %p415 = pneg %p177
        %p416 = pneg %p174
        %p417 = pneg %p198
        %p418 = pneg %p195
        %p419 = pneg %p219
        %p420 = pneg %p216
        %p421 = pneg %p240
        %p422 = pneg %p237
        %p423 = pneg %p261
        %p424 = pneg %p258
        %p425 = pneg %p287
        %p426 = pneg %p284
        %s427 = sand.u32 %s274, 1
        %s428 = scalar_lea.sflag [#allocation5], %s427
        %s429 = sand.u32 %s274, 1
        %s430 = scalar_lea.vmem [#allocation9], %s429
        %v432 = vld [vmem:[%s385] sm:$0xf]
        %v433 = vld [vmem:[%s2] sm:$0x1]
        %v435 = vunpack.c.l.b16 %v432
        %v436 = vpack.c.b16 %v435, %v435
        %v438 = vshrl.u32 %v436, 16
        %v440 = vrot.slane %v438, 7
        %v441 = vshll.u32 %v436, 16
        %v443 = vor.u32 %v440, %v441
        %vm445 = vcmask 1040384
        %vm446 = vsmask.f32 256
        %vm447 = vmand %vm445, %vm446
        %v448 = vsel %vm447, 0, %v443
        %v449 = vrot.slane %v441, 1
        %v450 = vor.u32 %v438, %v449
        %vm452 = vcmask 1043456
        %vm453 = vsmask.f32 3328
        %vm454 = vmand %vm452, %vm453
        %v455 = vsel %vm454, %v450, 0
        %v456 = vld [vmem:[#allocation6] sm:$0xf]
        %v457 = vld [vmem:[#allocation6 + $0x4] sm:$0xf]
        %v458 = vld [vmem:[#allocation6 + $0x8] sm:$0xf]
        %v459 = vld [vmem:[#allocation6 + $0xc] sm:$0xf]
        %s460 = scalar_lea.vmem [#allocation6], 16
        %v461 = vld [vmem:[%s460] sm:$0xf]
        %v462 = vld [vmem:[%s460 + $0x4] sm:$0xf]
        %v463 = vld [vmem:[%s460 + $0x8] sm:$0xf]
        %v464 = vld [vmem:[%s460 + $0xc] sm:$0xf]
        %v469 = vunpack.c.l.b16 %v461
        %v470 = vunpack.c.l.b16 %v462
        %v471 = vunpack.c.l.b16 %v463
        %v472 = vunpack.c.l.b16 %v464
        %v473 = vpack.c.b16 %v470, %v469
        %v474 = vpack.c.b16 %v472, %v471
        %vm477 = vcmask 261120
        %v479 = vsel %vm477, %v432, 0
        %481 = vmatprep.subr.bf16.mxu0 0
        %482 = vmatpush1.bf16.msra.mxu0 %v473
        %483 = vmatprep.subr.bf16.mxu0 0
        %484 = vmatpush1.bf16.msra.mxu0 %v474
        %485 = vmatprep.subr.bf16.mxu0 0
        %486 = vmatpush1.bf16.msra.mxu0 0
        %487 = vmatprep.subr.bf16.mxu0 0
        %488 = vmatpush1.bf16.msra.mxu0 0
        %489 = vmatprep.subr.bf16.mxu0 0
        %490 = vmatpush1.bf16.msra.mxu0 0
        %491 = vmatprep.subr.bf16.mxu0 0
        %492 = vmatpush1.bf16.msra.mxu0 0
        %493 = vmatprep.subr.bf16.mxu0 0
        %494 = vmatpush1.bf16.msra.mxu0 0
        %495 = vmatprep.subr.bf16.mxu0 0
        %496 = vmatpush1.bf16.msra.mxu0 0
        %497 = vmatprep.subr.bf16.mxu0 0
        %498 = vmatpush1.bf16.msra.mxu0 0
        %499 = vmatprep.subr.bf16.mxu0 0
        %500 = vmatpush1.bf16.msra.mxu0 0
        %501 = vmatprep.subr.bf16.mxu0 0
        %502 = vmatpush1.bf16.msra.mxu0 0
        %503 = vmatprep.subr.bf16.mxu0 0
        %504 = vmatpush1.bf16.msra.mxu0 0
        %505 = vmatprep.subr.bf16.mxu0 0
        %506 = vmatpush1.bf16.msra.mxu0 0
        %507 = vmatprep.subr.bf16.mxu0 0
        %508 = vmatpush1.bf16.msra.mxu0 0
        %509 = vmatprep.subr.bf16.mxu0 0
        %510 = vmatpush1.bf16.msra.mxu0 0
        %511 = vmatprep.subr.bf16.mxu0 0
        %512 = vmatpush1.bf16.msra.mxu0 0
        %513 = vmatprep.mubr.bf16.mxu0 0
        %514 = vmatmul.mubr.bf16.gmra.mrb[0].mxu0 %v479
        %v515 = vpop.f32.mrb[0].mxu0
        %v516 = vadd.f32 0.0, %v515
        %v517 = vpop.f32.mrb[0].mxu0
        %v518 = vpop.f32.mrb[0].mxu0
        %v519 = vpop.f32.mrb[0].mxu0
        %520 = vdwg.mxu0
        %v525 = vunpack.c.l.b16 %v456
        %v526 = vunpack.c.l.b16 %v457
        %v527 = vunpack.c.l.b16 %v458
        %v528 = vunpack.c.l.b16 %v459
        %v529 = vpack.c.b16 %v526, %v525
        %v530 = vpack.c.b16 %v528, %v527
        %v534 = vsel %vm477, %v448, 0
        %536 = vmatprep.subr.bf16.mxu0 0
        %537 = vmatpush1.bf16.msra.mxu0 %v529
        %538 = vmatprep.subr.bf16.mxu0 0
        %539 = vmatpush1.bf16.msra.mxu0 %v530
        %540 = vmatprep.subr.bf16.mxu0 0
        %541 = vmatpush1.bf16.msra.mxu0 0
        %542 = vmatprep.subr.bf16.mxu0 0
        %543 = vmatpush1.bf16.msra.mxu0 0
        %544 = vmatprep.subr.bf16.mxu0 0
        %545 = vmatpush1.bf16.msra.mxu0 0
        %546 = vmatprep.subr.bf16.mxu0 0
        %547 = vmatpush1.bf16.msra.mxu0 0
        %548 = vmatprep.subr.bf16.mxu0 0
        %549 = vmatpush1.bf16.msra.mxu0 0
        %550 = vmatprep.subr.bf16.mxu0 0
        %551 = vmatpush1.bf16.msra.mxu0 0
        %552 = vmatprep.subr.bf16.mxu0 0
        %553 = vmatpush1.bf16.msra.mxu0 0
        %554 = vmatprep.subr.bf16.mxu0 0
        %555 = vmatpush1.bf16.msra.mxu0 0
        %556 = vmatprep.subr.bf16.mxu0 0
        %557 = vmatpush1.bf16.msra.mxu0 0
        %558 = vmatprep.subr.bf16.mxu0 0
        %559 = vmatpush1.bf16.msra.mxu0 0
        %560 = vmatprep.subr.bf16.mxu0 0
        %561 = vmatpush1.bf16.msra.mxu0 0
        %562 = vmatprep.subr.bf16.mxu0 0
        %563 = vmatpush1.bf16.msra.mxu0 0
        %564 = vmatprep.subr.bf16.mxu0 0
        %565 = vmatpush1.bf16.msra.mxu0 0
        %566 = vmatprep.subr.bf16.mxu0 0
        %567 = vmatpush1.bf16.msra.mxu0 0
        %568 = vmatprep.mubr.bf16.mxu0 0
        %569 = vmatmul.mubr.bf16.gmra.mrb[0].mxu0 %v534
        %v570 = vpop.f32.mrb[0].mxu0
        %v571 = vadd.f32 %v516, %v570
        %v572 = vpop.f32.mrb[0].mxu0
        %v573 = vpop.f32.mrb[0].mxu0
        %v574 = vpop.f32.mrb[0].mxu0
        %575 = vdwg.mxu0
        %s576 = scalar_lea.vmem [#allocation6], 32
        %v577 = vld [vmem:[%s576] sm:$0xf]
        %v578 = vld [vmem:[%s576 + $0x4] sm:$0xf]
        %v579 = vld [vmem:[%s576 + $0x8] sm:$0xf]
        %v580 = vld [vmem:[%s576 + $0xc] sm:$0xf]
        %v585 = vunpack.c.l.b16 %v577
        %v586 = vunpack.c.l.b16 %v578
        %v587 = vunpack.c.l.b16 %v579
        %v588 = vunpack.c.l.b16 %v580
        %v589 = vpack.c.b16 %v586, %v585
        %v590 = vpack.c.b16 %v588, %v587
        %v594 = vsel %vm477, %v455, 0
        %596 = vmatprep.subr.bf16.mxu0 0
        %597 = vmatpush1.bf16.msra.mxu0 %v589
        %598 = vmatprep.subr.bf16.mxu0 0
        %599 = vmatpush1.bf16.msra.mxu0 %v590
        %600 = vmatprep.subr.bf16.mxu0 0
        %601 = vmatpush1.bf16.msra.mxu0 0
        %602 = vmatprep.subr.bf16.mxu0 0
        %603 = vmatpush1.bf16.msra.mxu0 0
        %604 = vmatprep.subr.bf16.mxu0 0
        %605 = vmatpush1.bf16.msra.mxu0 0
        %606 = vmatprep.subr.bf16.mxu0 0
        %607 = vmatpush1.bf16.msra.mxu0 0
        %608 = vmatprep.subr.bf16.mxu0 0
        %609 = vmatpush1.bf16.msra.mxu0 0
        %610 = vmatprep.subr.bf16.mxu0 0
        %611 = vmatpush1.bf16.msra.mxu0 0
        %612 = vmatprep.subr.bf16.mxu0 0
        %613 = vmatpush1.bf16.msra.mxu0 0
        %614 = vmatprep.subr.bf16.mxu0 0
        %615 = vmatpush1.bf16.msra.mxu0 0
        %616 = vmatprep.subr.bf16.mxu0 0
        %617 = vmatpush1.bf16.msra.mxu0 0
        %618 = vmatprep.subr.bf16.mxu0 0
        %619 = vmatpush1.bf16.msra.mxu0 0
        %620 = vmatprep.subr.bf16.mxu0 0
        %621 = vmatpush1.bf16.msra.mxu0 0
        %622 = vmatprep.subr.bf16.mxu0 0
        %623 = vmatpush1.bf16.msra.mxu0 0
        %624 = vmatprep.subr.bf16.mxu0 0
        %625 = vmatpush1.bf16.msra.mxu0 0
        %626 = vmatprep.subr.bf16.mxu0 0
        %627 = vmatpush1.bf16.msra.mxu0 0
        %628 = vmatprep.mubr.bf16.mxu0 0
        %629 = vmatmul.mubr.bf16.gmra.mrb[0].mxu0 %v594
        %v630 = vpop.f32.mrb[0].mxu0
        %v631 = vadd.f32 0.0, %v630
        %v632 = vpop.f32.mrb[0].mxu0
        %v633 = vpop.f32.mrb[0].mxu0
        %v634 = vpop.f32.mrb[0].mxu0
        %635 = vdwg.mxu0
        %v636 = vadd.f32 %v571, %v631
        %v638 = vlaneseq
        %v639 = vshrl.u32 %v638, 7
        %v640 = vsub.s32 0, %v639
        %v641 = vrot.slane %v433, %v640
        %v643 = vadd.f32 %v636, %v641
        %v644 = vld [vmem:[%s3] sm:$0x1]
        %v645 = vld [vmem:[%s4] sm:$0x1]
        %646 = vadd.xlane.f32.xlu0 %v643
        %v647 = vpop.xlane.xlu0 %646
        %v648 = vmul.f32 %v647, 0.03125
        %v649 = vmul.f32 %v643, %v643
        %650 = vadd.xlane.f32.xlu0 %v649
        %v651 = vpop.xlane.xlu0 %650
        %v652 = vmul.f32 %v651, 0.03125
        %v653 = vmul.f32 %v648, %v648
        %v654 = vsub.f32 %v652, %v653
        %v655 = vsub.f32 %v643, %v648
        %v656 = vadd.f32 %v654, 1e-05
        %v657 = vrsqrt.pop %v656
        %v658 = vmul.f32 %v655, %v657
        %v660 = vlaneseq
        %v661 = vshrl.u32 %v660, 7
        %v662 = vsub.s32 0, %v661
        %v663 = vrot.slane %v644, %v662
        %v665 = vmul.f32 %v658, %v663
        %v667 = vlaneseq
        %v668 = vshrl.u32 %v667, 7
        %v669 = vsub.s32 0, %v668
        %v670 = vrot.slane %v645, %v669
        %v672 = vadd.f32 %v665, %v670
        %v673 = vmax.f32 %v672, 0.0
        %v674 = vpack.c.bf16 %v673, %v673
        %v675 = vld [vmem:[%s6] sm:$0x1]
        %v677 = vshrl.u32 %v674, 16
        %v679 = vrot.slane %v677, 7
        %v680 = vshll.u32 %v674, 16
        %v682 = vor.u32 %v679, %v680
        %v684 = vsel %vm447, 0, %v682
        %v685 = vrot.slane %v680, 1
        %v686 = vor.u32 %v677, %v685
        %v688 = vsel %vm454, %v686, 0
        %v689 = vld [vmem:[#allocation8] sm:$0xf]
        %v690 = vld [vmem:[#allocation8 + $0x4] sm:$0xf]
        %v691 = vld [vmem:[#allocation8 + $0x8] sm:$0xf]
        %v692 = vld [vmem:[#allocation8 + $0xc] sm:$0xf]
        %v693 = vld [vmem:[#allocation8 + $0x10] sm:$0xf]
        %v694 = vld [vmem:[#allocation8 + $0x14] sm:$0xf]
        %v695 = vld [vmem:[#allocation8 + $0x18] sm:$0xf]
        %v696 = vld [vmem:[#allocation8 + $0x1c] sm:$0xf]
        %v697 = vld [vmem:[#allocation8 + $0x20] sm:$0xf]
        %v698 = vld [vmem:[#allocation8 + $0x24] sm:$0xf]
        %v699 = vld [vmem:[#allocation8 + $0x28] sm:$0xf]
        %v700 = vld [vmem:[#allocation8 + $0x2c] sm:$0xf]
        %v701 = vld [vmem:[#allocation8 + $0x30] sm:$0xf]
        %v702 = vld [vmem:[#allocation8 + $0x34] sm:$0xf]
        %v703 = vld [vmem:[#allocation8 + $0x38] sm:$0xf]
        %v704 = vld [vmem:[#allocation8 + $0x3c] sm:$0xf]
        %s705 = scalar_lea.vmem [#allocation8], 64
        %v706 = vld [vmem:[%s705] sm:$0xf]
        %v707 = vld [vmem:[%s705 + $0x4] sm:$0xf]
        %v708 = vld [vmem:[%s705 + $0x8] sm:$0xf]
        %v709 = vld [vmem:[%s705 + $0xc] sm:$0xf]
        %v710 = vld [vmem:[%s705 + $0x10] sm:$0xf]
        %v711 = vld [vmem:[%s705 + $0x14] sm:$0xf]
        %v712 = vld [vmem:[%s705 + $0x18] sm:$0xf]
        %v713 = vld [vmem:[%s705 + $0x1c] sm:$0xf]
        %v714 = vld [vmem:[%s705 + $0x20] sm:$0xf]
        %v715 = vld [vmem:[%s705 + $0x24] sm:$0xf]
        %v716 = vld [vmem:[%s705 + $0x28] sm:$0xf]
        %v717 = vld [vmem:[%s705 + $0x2c] sm:$0xf]
        %v718 = vld [vmem:[%s705 + $0x30] sm:$0xf]
        %v719 = vld [vmem:[%s705 + $0x34] sm:$0xf]
        %v720 = vld [vmem:[%s705 + $0x38] sm:$0xf]
        %v721 = vld [vmem:[%s705 + $0x3c] sm:$0xf]
        %v738 = vunpack.c.l.b16 %v706
        %v739 = vunpack.c.l.b16 %v707
        %v740 = vunpack.c.l.b16 %v708
        %v741 = vunpack.c.l.b16 %v709
        %v742 = vunpack.c.l.b16 %v710
        %v743 = vunpack.c.l.b16 %v711
        %v744 = vunpack.c.l.b16 %v712
        %v745 = vunpack.c.l.b16 %v713
        %v746 = vunpack.c.l.b16 %v714
        %v747 = vunpack.c.l.b16 %v715
        %v748 = vunpack.c.l.b16 %v716
        %v749 = vunpack.c.l.b16 %v717
        %v750 = vunpack.c.l.b16 %v718
        %v751 = vunpack.c.l.b16 %v719
        %v752 = vunpack.c.l.b16 %v720
        %v753 = vunpack.c.l.b16 %v721
        %v754 = vpack.c.b16 %v739, %v738
        %v755 = vpack.c.b16 %v741, %v740
        %v756 = vpack.c.b16 %v743, %v742
        %v757 = vpack.c.b16 %v745, %v744
        %v758 = vpack.c.b16 %v747, %v746
        %v759 = vpack.c.b16 %v749, %v748
        %v760 = vpack.c.b16 %v751, %v750
        %v761 = vpack.c.b16 %v753, %v752
        %770 = vmatprep.subr.bf16.mxu0 0
        %771 = vmatpush1.bf16.msra.mxu0 %v754
        %772 = vmatprep.subr.bf16.mxu0 0
        %773 = vmatpush1.bf16.msra.mxu0 %v755
        %774 = vmatprep.subr.bf16.mxu0 0
        %775 = vmatpush1.bf16.msra.mxu0 %v756
        %776 = vmatprep.subr.bf16.mxu0 0
        %777 = vmatpush1.bf16.msra.mxu0 %v757
        %778 = vmatprep.subr.bf16.mxu0 0
        %779 = vmatpush1.bf16.msra.mxu0 %v758
        %780 = vmatprep.subr.bf16.mxu0 0
        %781 = vmatpush1.bf16.msra.mxu0 %v759
        %782 = vmatprep.subr.bf16.mxu0 0
        %783 = vmatpush1.bf16.msra.mxu0 %v760
        %784 = vmatprep.subr.bf16.mxu0 0
        %785 = vmatpush1.bf16.msra.mxu0 %v761
        %786 = vmatprep.subr.bf16.mxu0 0
        %787 = vmatpush1.bf16.msra.mxu0 0
        %788 = vmatprep.subr.bf16.mxu0 0
        %789 = vmatpush1.bf16.msra.mxu0 0
        %790 = vmatprep.subr.bf16.mxu0 0
        %791 = vmatpush1.bf16.msra.mxu0 0
        %792 = vmatprep.subr.bf16.mxu0 0
        %793 = vmatpush1.bf16.msra.mxu0 0
        %794 = vmatprep.subr.bf16.mxu0 0
        %795 = vmatpush1.bf16.msra.mxu0 0
        %796 = vmatprep.subr.bf16.mxu0 0
        %797 = vmatpush1.bf16.msra.mxu0 0
        %798 = vmatprep.subr.bf16.mxu0 0
        %799 = vmatpush1.bf16.msra.mxu0 0
        %800 = vmatprep.subr.bf16.mxu0 0
        %801 = vmatpush1.bf16.msra.mxu0 0
        %802 = vmatprep.mubr.bf16.mxu0 0
        %803 = vmatmul.mubr.bf16.gmra.mrb[0].mxu0 %v674
        %v804 = vpop.f32.mrb[0].mxu0
        %v805 = vadd.f32 0.0, %v804
        %v806 = vpop.f32.mrb[0].mxu0
        %v807 = vpop.f32.mrb[0].mxu0
        %v808 = vpop.f32.mrb[0].mxu0
        %809 = vdwg.mxu0
        %v826 = vunpack.c.l.b16 %v689
        %v827 = vunpack.c.l.b16 %v690
        %v828 = vunpack.c.l.b16 %v691
        %v829 = vunpack.c.l.b16 %v692
        %v830 = vunpack.c.l.b16 %v693
        %v831 = vunpack.c.l.b16 %v694
        %v832 = vunpack.c.l.b16 %v695
        %v833 = vunpack.c.l.b16 %v696
        %v834 = vunpack.c.l.b16 %v697
        %v835 = vunpack.c.l.b16 %v698
        %v836 = vunpack.c.l.b16 %v699
        %v837 = vunpack.c.l.b16 %v700
        %v838 = vunpack.c.l.b16 %v701
        %v839 = vunpack.c.l.b16 %v702
        %v840 = vunpack.c.l.b16 %v703
        %v841 = vunpack.c.l.b16 %v704
        %v842 = vpack.c.b16 %v827, %v826
        %v843 = vpack.c.b16 %v829, %v828
        %v844 = vpack.c.b16 %v831, %v830
        %v845 = vpack.c.b16 %v833, %v832
        %v846 = vpack.c.b16 %v835, %v834
        %v847 = vpack.c.b16 %v837, %v836
        %v848 = vpack.c.b16 %v839, %v838
        %v849 = vpack.c.b16 %v841, %v840
        %858 = vmatprep.subr.bf16.mxu0 0
        %859 = vmatpush1.bf16.msra.mxu0 %v842
        %860 = vmatprep.subr.bf16.mxu0 0
        %861 = vmatpush1.bf16.msra.mxu0 %v843
        %862 = vmatprep.subr.bf16.mxu0 0
        %863 = vmatpush1.bf16.msra.mxu0 %v844
        %864 = vmatprep.subr.bf16.mxu0 0
        %865 = vmatpush1.bf16.msra.mxu0 %v845
        %866 = vmatprep.subr.bf16.mxu0 0
        %867 = vmatpush1.bf16.msra.mxu0 %v846
        %868 = vmatprep.subr.bf16.mxu0 0
        %869 = vmatpush1.bf16.msra.mxu0 %v847
        %870 = vmatprep.subr.bf16.mxu0 0
        %871 = vmatpush1.bf16.msra.mxu0 %v848
        %872 = vmatprep.subr.bf16.mxu0 0
        %873 = vmatpush1.bf16.msra.mxu0 %v849
        %874 = vmatprep.subr.bf16.mxu0 0
        %875 = vmatpush1.bf16.msra.mxu0 0
        %876 = vmatprep.subr.bf16.mxu0 0
        %877 = vmatpush1.bf16.msra.mxu0 0
        %878 = vmatprep.subr.bf16.mxu0 0
        %879 = vmatpush1.bf16.msra.mxu0 0
        %880 = vmatprep.subr.bf16.mxu0 0
        %881 = vmatpush1.bf16.msra.mxu0 0
        %882 = vmatprep.subr.bf16.mxu0 0
        %883 = vmatpush1.bf16.msra.mxu0 0
        %884 = vmatprep.subr.bf16.mxu0 0
        %885 = vmatpush1.bf16.msra.mxu0 0
        %886 = vmatprep.subr.bf16.mxu0 0
        %887 = vmatpush1.bf16.msra.mxu0 0
        %888 = vmatprep.subr.bf16.mxu0 0
        %889 = vmatpush1.bf16.msra.mxu0 0
        %890 = vmatprep.mubr.bf16.mxu0 0
        %891 = vmatmul.mubr.bf16.gmra.mrb[0].mxu0 %v684
        %v892 = vpop.f32.mrb[0].mxu0
        %v893 = vadd.f32 %v805, %v892
        %v894 = vpop.f32.mrb[0].mxu0
        %v895 = vpop.f32.mrb[0].mxu0
        %v896 = vpop.f32.mrb[0].mxu0
        %897 = vdwg.mxu0
        %s898 = scalar_lea.vmem [#allocation8], 128
        %v899 = vld [vmem:[%s898] sm:$0xf]
        %v900 = vld [vmem:[%s898 + $0x4] sm:$0xf]
        %v901 = vld [vmem:[%s898 + $0x8] sm:$0xf]
        %v902 = vld [vmem:[%s898 + $0xc] sm:$0xf]
        %v903 = vld [vmem:[%s898 + $0x10] sm:$0xf]
        %v904 = vld [vmem:[%s898 + $0x14] sm:$0xf]
        %v905 = vld [vmem:[%s898 + $0x18] sm:$0xf]
        %v906 = vld [vmem:[%s898 + $0x1c] sm:$0xf]
        %v907 = vld [vmem:[%s898 + $0x20] sm:$0xf]
        %v908 = vld [vmem:[%s898 + $0x24] sm:$0xf]
        %v909 = vld [vmem:[%s898 + $0x28] sm:$0xf]
        %v910 = vld [vmem:[%s898 + $0x2c] sm:$0xf]
        %v911 = vld [vmem:[%s898 + $0x30] sm:$0xf]
        %v912 = vld [vmem:[%s898 + $0x34] sm:$0xf]
        %v913 = vld [vmem:[%s898 + $0x38] sm:$0xf]
        %v914 = vld [vmem:[%s898 + $0x3c] sm:$0xf]
        %v931 = vunpack.c.l.b16 %v899
        %v932 = vunpack.c.l.b16 %v900
        %v933 = vunpack.c.l.b16 %v901
        %v934 = vunpack.c.l.b16 %v902
        %v935 = vunpack.c.l.b16 %v903
        %v936 = vunpack.c.l.b16 %v904
        %v937 = vunpack.c.l.b16 %v905
        %v938 = vunpack.c.l.b16 %v906
        %v939 = vunpack.c.l.b16 %v907
        %v940 = vunpack.c.l.b16 %v908
        %v941 = vunpack.c.l.b16 %v909
        %v942 = vunpack.c.l.b16 %v910
        %v943 = vunpack.c.l.b16 %v911
        %v944 = vunpack.c.l.b16 %v912
        %v945 = vunpack.c.l.b16 %v913
        %v946 = vunpack.c.l.b16 %v914
        %v947 = vpack.c.b16 %v932, %v931
        %v948 = vpack.c.b16 %v934, %v933
        %v949 = vpack.c.b16 %v936, %v935
        %v950 = vpack.c.b16 %v938, %v937
        %v951 = vpack.c.b16 %v940, %v939
        %v952 = vpack.c.b16 %v942, %v941
        %v953 = vpack.c.b16 %v944, %v943
        %v954 = vpack.c.b16 %v946, %v945
        %963 = vmatprep.subr.bf16.mxu0 0
        %964 = vmatpush1.bf16.msra.mxu0 %v947
        %965 = vmatprep.subr.bf16.mxu0 0
        %966 = vmatpush1.bf16.msra.mxu0 %v948
        %967 = vmatprep.subr.bf16.mxu0 0
        %968 = vmatpush1.bf16.msra.mxu0 %v949
        %969 = vmatprep.subr.bf16.mxu0 0
        %970 = vmatpush1.bf16.msra.mxu0 %v950
        %971 = vmatprep.subr.bf16.mxu0 0
        %972 = vmatpush1.bf16.msra.mxu0 %v951
        %973 = vmatprep.subr.bf16.mxu0 0
        %974 = vmatpush1.bf16.msra.mxu0 %v952
        %975 = vmatprep.subr.bf16.mxu0 0
        %976 = vmatpush1.bf16.msra.mxu0 %v953
        %977 = vmatprep.subr.bf16.mxu0 0
        %978 = vmatpush1.bf16.msra.mxu0 %v954
        %979 = vmatprep.subr.bf16.mxu0 0
        %980 = vmatpush1.bf16.msra.mxu0 0
        %981 = vmatprep.subr.bf16.mxu0 0
        %982 = vmatpush1.bf16.msra.mxu0 0
        %983 = vmatprep.subr.bf16.mxu0 0
        %984 = vmatpush1.bf16.msra.mxu0 0
        %985 = vmatprep.subr.bf16.mxu0 0
        %986 = vmatpush1.bf16.msra.mxu0 0
        %987 = vmatprep.subr.bf16.mxu0 0
        %988 = vmatpush1.bf16.msra.mxu0 0
        %989 = vmatprep.subr.bf16.mxu0 0
        %990 = vmatpush1.bf16.msra.mxu0 0
        %991 = vmatprep.subr.bf16.mxu0 0
        %992 = vmatpush1.bf16.msra.mxu0 0
        %993 = vmatprep.subr.bf16.mxu0 0
        %994 = vmatpush1.bf16.msra.mxu0 0
        %995 = vmatprep.mubr.bf16.mxu0 0
        %996 = vmatmul.mubr.bf16.gmra.mrb[0].mxu0 %v688
        %v997 = vpop.f32.mrb[0].mxu0
        %v998 = vadd.f32 0.0, %v997
        %v999 = vpop.f32.mrb[0].mxu0
        %v1000 = vpop.f32.mrb[0].mxu0
        %v1001 = vpop.f32.mrb[0].mxu0
        %1002 = vdwg.mxu0
        %v1003 = vadd.f32 %v893, %v998
        %v1005 = vlaneseq
        %v1006 = vshrl.u32 %v1005, 7
        %v1007 = vsub.s32 0, %v1006
        %v1008 = vrot.slane %v675, %v1007
        %v1010 = vadd.f32 %v1003, %v1008
        %v1011 = vld [vmem:[%s7] sm:$0x1]
        %v1012 = vld [vmem:[%s8] sm:$0x1]
        %1013 = vadd.xlane.f32.xlu0 %v1010
        %v1014 = vpop.xlane.xlu0 %1013
        %v1015 = vmul.f32 %v1014, 0.03125
        %v1016 = vmul.f32 %v1010, %v1010
        %1017 = vadd.xlane.f32.xlu0 %v1016
        %v1018 = vpop.xlane.xlu0 %1017
        %v1019 = vmul.f32 %v1018, 0.03125
        %v1020 = vmul.f32 %v1015, %v1015
        %v1021 = vsub.f32 %v1019, %v1020
        %v1022 = vsub.f32 %v1010, %v1015
        %v1023 = vadd.f32 %v1021, 1e-05
        %v1024 = vrsqrt.pop %v1023
        %v1025 = vmul.f32 %v1022, %v1024
        %v1027 = vlaneseq
        %v1028 = vshrl.u32 %v1027, 7
        %v1029 = vsub.s32 0, %v1028
        %v1030 = vrot.slane %v1011, %v1029
        %v1032 = vmul.f32 %v1025, %v1030
        %v1034 = vlaneseq
        %v1035 = vshrl.u32 %v1034, 7
        %v1036 = vsub.s32 0, %v1035
        %v1037 = vrot.slane %v1012, %v1036
        %v1039 = vadd.f32 %v1032, %v1037
        %v1040 = vmax.f32 %v1039, 0.0
        %v1041 = vld [vmem:[%s9] sm:$0x1]
        %v1043 = vlaneseq
        %v1044 = vshrl.u32 %v1043, 7
        %v1045 = vsub.s32 0, %v1044
        %v1046 = vrot.slane %v1041, %v1045
        %v1048 = vmul.f32 %v1040, %v1046
        %1049 = vadd.xlane.f32.xlu0 %v1048
        %v1050 = vpop.xlane.xlu0 %1049
        %s1051 = sld [smem:[#allocation2]]
        %v1052 = vstv %s1051
        %v1053 = vadd.f32 %v1050, %v1052
        %v1055 = vlaneseq
        %v1056 = vand.u32 %v1055, 127
        %v1057 = vlaneseq
        %v1058 = vshrl.u32 %v1057, 7
        %v1059 = vsub.s32 %v1056, %v1058
        %v1060 = vrot.slane %v1053, %v1059
        %vm1062 = vcmask 57344
        %1063 = vst.msk [vmem:[%s430] sm:$0x1] %vm1062, %v1060
        %s1064 = sand.u32 %s274, 1
        %s1065 = scalar_lea.sflag [#allocation5], %s1064
        %s1066 = sand.u32 %s274, 1
        %s1067 = scalar_lea.vmem [#allocation9], %s1066
        // Predicated region
        $region77: #{tpu_custom_call.1} parent=63 // pred_check
          %p1068 = pneg %p284
        $region78: #{tpu_custom_call.1} parent=63 // pred_check_branch
          %1070 = sbr.rel (%p1068) target = $region80
        $region79: #{tpu_custom_call.1} parent=63 // pred_region
          %s1072 = ssub.s32 16, 16
          %1073 = vsyncadd %s1065, %s1072
          %s1074 = smul.addr %s30, 16
          %s1075 = scalar_lea.hbm %s11, %s1074
          %s1077 = sshll.u32 %s1067, 4
          %s1078 = int_to_ptr.vmem [resolvable:$true] %s1077
          %1080 = dma.vmem_to_hbm [thread:$0]  %s1078, 16, %s1075, %s1065
        $region80: #{tpu_custom_call.1} parent=63 // pred_fallthru
          _
      $region64: #{tpu_custom_call.1} parent=5 // pred_fallthru
        _
      %p1081 = scmp.le.s32.totalorder 2, %s25
      // Predicated region
      $region81: #{tpu_custom_call.1} parent=5 // pred_check
        %p1082 = pneg %p1081
      $region82: #{tpu_custom_call.1} parent=5 // pred_check_branch
        %1084 = sbr.rel (%p1082) target = $region84
      $region83: #{tpu_custom_call.1} parent=5 // pred_region
        %s1085 = ssub.s32 %s25, 2
        // Predicated region
        $region85: #{tpu_custom_call.1} parent=83 // pred_check
          %p1086 = pneg %p290
        $region86: #{tpu_custom_call.1} parent=83 // pred_check_branch
          %1088 = sbr.rel (%p1086) target = $region88
        $region87: #{tpu_custom_call.1} parent=83 // pred_region
          %s1089 = sand.u32 %s275, 1
          %s1090 = scalar_lea.sflag [#allocation5], %s1089
          %s1091 = sand.u32 %s275, 1
          %s1092 = scalar_lea.vmem [#allocation9], %s1091
          %1093 = dma.done %s1090, 16
        $region88: #{tpu_custom_call.1} parent=83 // pred_fallthru
          _
      $region84: #{tpu_custom_call.1} parent=5 // pred_fallthru
        _
    $region6: #{tpu_custom_call.1} parent=1 // loop_footer
      %s29 = sadd.s32 1, %s25
    $region7: #{tpu_custom_call.1} parent=1 // loop_footer_branch
      %24 = sbr.rel target = $region3
    $region8: #{tpu_custom_call.1} parent=1 // loop_exit
      _
    %1094 = vsyncpa [#allocation4], 1
    %s1095 = scalar_lea.sflag [#allocation4], 1
    %1096 = vsyncpa %s1095, 1
    %1097 = vsyncpa [#allocation7], 1
    %1098 = vsyncpa [#allocation5], 1
    %s1099 = scalar_lea.sflag [#allocation5], 1
    %1100 = vsyncpa %s1099, 1

</llo_original>
